<compile_context>
chip_gen: v7x
topology: tpu7x:2x2x1
jax: 0.10.0
libtpu: 0.0.40
codegen_flags: <defaults>
</compile_context>

<pallas_src>
import functools

import jax
import jax.numpy as jnp
from jax.experimental import pallas as pl
from jax.experimental.pallas import tpu as pltpu

SUBLANE = 8          # f32 sublane granule for the batch-tiled x / out blocks
_MIN_SPLIT_ROWS = 64  # don't split tiny batches: per-grid-step overhead dominates


def _round_up(n: int, m: int) -> int:
    return ((n + m - 1) // m) * m


def _cdiv(a: int, b: int) -> int:
    return (a + b - 1) // b


def _fused_mlp_kernel(*refs, num_layers: int):
    """One batch-tile step of the fused MLP.

    refs = (x_ref, w0, b0, w1, b1, ..., w_{L-1}, b_{L-1}, o_ref).
    Intermediate activations live as jnp values (vregs / VMEM spill), never
    touch HBM; only the final result is stored.
    """
    x_ref = refs[0]
    o_ref = refs[-1]
    wb = refs[1:-1]

    y = x_ref[...].astype(jnp.float32)
    for i in range(num_layers):
        w = wb[2 * i][...]          # bf16 (F_in, F_out), resident in VMEM
        b = wb[2 * i + 1][...]      # f32  (1, F_out)
        # bf16 MXU inputs, f32 accumulation; bias add + ReLU in f32.
        y = jnp.dot(y.astype(jnp.bfloat16), w,
                    preferred_element_type=jnp.float32) + b
        if i < num_layers - 1:      # ReLU on all but the last layer
            y = jnp.maximum(y, 0.0)
    o_ref[...] = y.astype(o_ref.dtype)


def pack_mlp_params(params):
    """One-time packing (do NOT call per forward): W -> bf16, b -> f32 (1,F_out)."""
    packed = []
    for w, b in params:
        packed.append(jnp.asarray(w, jnp.bfloat16))
        packed.append(jnp.asarray(b, jnp.float32).reshape(1, -1))
    return tuple(packed)


def _choose_batch_tiling(B: int, max_batch_tile: int):
    """Balanced batch tiles; >=2 (even) grid steps when there's enough work
    so v7x's two TensorCores both participate (no-op on v5e/v6e)."""
    pB0 = _round_up(B, SUBLANE)
    n_tiles = _cdiv(pB0, max_batch_tile)
    if pB0 >= 2 * _MIN_SPLIT_ROWS:
        n_tiles = _round_up(max(n_tiles, 2), 2)
    b_tile = _round_up(_cdiv(pB0, n_tiles), SUBLANE)
    return b_tile, n_tiles


def mlp_forward_pallas(x, packed_params, *, max_batch_tile: int = 512):
    """x: (B, F_in) f32; packed_params: flat tuple (w0,b0,w1,b1,...) from
    pack_mlp_params. Returns (B, outputs) f32."""
    num_layers = len(packed_params) // 2
    B, F_in = x.shape
    F_out = packed_params[-1].shape[-1]

    b_tile, n_tiles = _choose_batch_tiling(B, max_batch_tile)
    pB = b_tile * n_tiles

    xp = x
    if pB != B:
        # Only when B isn't already tile-aligned; padded rows are bias-only
        # garbage that gets sliced off below.
        xp = jnp.zeros((pB, F_in), x.dtype).at[:B].set(x)

    in_specs = [pl.BlockSpec((b_tile, F_in), lambda i: (i, 0))]
    for p in packed_params:
        # Full-array block, constant index -> DMA'd once, resident across steps.
        in_specs.append(pl.BlockSpec(p.shape, lambda i: (0, 0)))
    # Output kept at natural width (tiny bytes); masked stores are negligible here.
    out_specs = pl.BlockSpec((b_tile, F_out), lambda i: (i, 0))

    dims = [F_in] + [packed_params[2 * i].shape[1] for i in range(num_layers)]
    flops = 2 * pB * sum(dims[i] * dims[i + 1] for i in range(num_layers))
    bytes_accessed = (
        xp.size * xp.dtype.itemsize
        + sum(p.size * p.dtype.itemsize for p in packed_params)
        + pB * F_out * jnp.dtype(x.dtype).itemsize
    )

    kernel = functools.partial(_fused_mlp_kernel, num_layers=num_layers)
    y = pl.pallas_call(
        kernel,
        out_shape=jax.ShapeDtypeStruct((pB, F_out), x.dtype),
        grid=(n_tiles,),
        in_specs=in_specs,
        out_specs=out_specs,
        compiler_params=pltpu.CompilerParams(
            # Batch axis is independent -> shard across v7x's 2 TensorCores.
            dimension_semantics=("parallel",),
        ),
        cost_estimate=pl.CostEstimate(
            flops=flops, transcendentals=0, bytes_accessed=bytes_accessed
        ),
    )(xp, *packed_params)

    if pB != B:
        y = y[:B]
    return y


def init_mlp_params(key, inputs: int, outputs: int):
    """Deterministic kaiming-normal weights (fan_in, relu gain), zero bias."""
    embed_chs = [256, 128, 64, 32]
    dims = [inputs] + embed_chs + [outputs]
    params = []
    for i in range(len(dims) - 1):
        key, wkey = jax.random.split(key)
        fan_in, fan_out = dims[i], dims[i + 1]
        std = (2.0 / fan_in) ** 0.5  # kaiming_normal_, nonlinearity='relu'
        w = std * jax.random.normal(wkey, (fan_in, fan_out), dtype=jnp.float32)
        b = jnp.zeros((fan_out,), dtype=jnp.float32)
        params.append((w, b))
    return params


@jax.jit
def mlp_forward(x, packed_params):
    return mlp_forward_pallas(x, packed_params)


if __name__ == "__main__":
    inputs, outputs = 32, 10
    batch = 8

    key = jax.random.PRNGKey(0)
    key, xkey = jax.random.split(key)
    x = jax.random.normal(xkey, (batch, inputs), dtype=jnp.float32)

    params = init_mlp_params(key, inputs, outputs)
    packed = pack_mlp_params(params)   # one-time packing, outside the jit path

    y = mlp_forward(x, packed)
    jax.block_until_ready(y)

    # Pure-JAX f32 reference check (tolerance loosened for bf16 matmul inputs).
    ref = x
    for i, (w, b) in enumerate(params):
        ref = ref @ w + b
        if i < len(params) - 1:
            ref = jnp.maximum(ref, 0.0)
    assert y.shape == (batch, outputs)
    assert jnp.allclose(y, ref, atol=3e-2, rtol=3e-2)

    print("KERNEL_OK")
</pallas_src>

<mosaic_0001>
module attributes {stable_mosaic.version = 11 : i64} {
  func.func @_fused_mlp_kernel(%arg0: i32, %arg1: memref<8x32xf32, #tpu.memory_space<vmem>>, %arg2: memref<32x256xbf16, #tpu.memory_space<vmem>>, %arg3: memref<1x256xf32, #tpu.memory_space<vmem>>, %arg4: memref<256x128xbf16, #tpu.memory_space<vmem>>, %arg5: memref<1x128xf32, #tpu.memory_space<vmem>>, %arg6: memref<128x64xbf16, #tpu.memory_space<vmem>>, %arg7: memref<1x64xf32, #tpu.memory_space<vmem>>, %arg8: memref<64x32xbf16, #tpu.memory_space<vmem>>, %arg9: memref<1x32xf32, #tpu.memory_space<vmem>>, %arg10: memref<32x10xbf16, #tpu.memory_space<vmem>>, %arg11: memref<1x10xf32, #tpu.memory_space<vmem>>, %arg12: memref<8x10xf32, #tpu.memory_space<vmem>>) attributes {dimension_semantics = [#tpu.dimension_semantics<parallel>], iteration_bounds = array<i64: 1>, scalar_prefetch = 0 : i64, scratch_operands = 0 : i64, tpu.core_type = #tpu.core_type<tc>, window_params = [{transform_indices = @transform_0, window_bounds = array<i64: 8, 32>}, {pipeline_mode = #tpu.pipeline_mode<synchronous>, transform_indices = @transform_1, window_bounds = array<i64: 32, 256>}, {pipeline_mode = #tpu.pipeline_mode<synchronous>, transform_indices = @transform_2, window_bounds = array<i64: 1, 256>}, {pipeline_mode = #tpu.pipeline_mode<synchronous>, transform_indices = @transform_3, window_bounds = array<i64: 256, 128>}, {pipeline_mode = #tpu.pipeline_mode<synchronous>, transform_indices = @transform_4, window_bounds = array<i64: 1, 128>}, {pipeline_mode = #tpu.pipeline_mode<synchronous>, transform_indices = @transform_5, window_bounds = array<i64: 128, 64>}, {pipeline_mode = #tpu.pipeline_mode<synchronous>, transform_indices = @transform_6, window_bounds = array<i64: 1, 64>}, {pipeline_mode = #tpu.pipeline_mode<synchronous>, transform_indices = @transform_7, window_bounds = array<i64: 64, 32>}, {pipeline_mode = #tpu.pipeline_mode<synchronous>, transform_indices = @transform_8, window_bounds = array<i64: 1, 32>}, {pipeline_mode = #tpu.pipeline_mode<synchronous>, transform_indices = @transform_9, window_bounds = array<i64: 32, 10>}, {pipeline_mode = #tpu.pipeline_mode<synchronous>, transform_indices = @transform_10, window_bounds = array<i64: 1, 10>}, {transform_indices = @transform_11, window_bounds = array<i64: 8, 10>}]} {
    %c0 = arith.constant 0 : index
    %c0_0 = arith.constant 0 : index
    %0 = vector.load %arg1[%c0, %c0_0] : memref<8x32xf32, #tpu.memory_space<vmem>>, vector<8x32xf32>
    %c0_1 = arith.constant 0 : index
    %c0_2 = arith.constant 0 : index
    %1 = vector.load %arg2[%c0_1, %c0_2] : memref<32x256xbf16, #tpu.memory_space<vmem>>, vector<32x256xbf16>
    %c0_3 = arith.constant 0 : index
    %c0_4 = arith.constant 0 : index
    %2 = vector.load %arg3[%c0_3, %c0_4] : memref<1x256xf32, #tpu.memory_space<vmem>>, vector<1x256xf32>
    %3 = arith.truncf %0 : vector<8x32xf32> to vector<8x32xbf16>
    %cst = arith.constant dense<0.000000e+00> : vector<8x256xf32>
    %4 = tpu.matmul %3, %1, %cst {dimension_numbers = #tpu.dot_dimension_numbers<[1], [0], [0], [1], [0, 0, 1, 1], [], []>} : vector<8x32xbf16>, vector<32x256xbf16>, vector<8x256xf32> -> vector<8x256xf32>
    %5 = vector.broadcast %2 : vector<1x256xf32> to vector<8x256xf32>
    %6 = arith.addf %4, %5 : vector<8x256xf32>
    %cst_5 = arith.constant 0.000000e+00 : f32
    %7 = vector.broadcast %cst_5 : f32 to vector<8x256xf32>
    %8 = arith.maximumf %6, %7 : vector<8x256xf32>
    %c0_6 = arith.constant 0 : index
    %c0_7 = arith.constant 0 : index
    %9 = vector.load %arg4[%c0_6, %c0_7] : memref<256x128xbf16, #tpu.memory_space<vmem>>, vector<256x128xbf16>
    %c0_8 = arith.constant 0 : index
    %c0_9 = arith.constant 0 : index
    %10 = vector.load %arg5[%c0_8, %c0_9] : memref<1x128xf32, #tpu.memory_space<vmem>>, vector<1x128xf32>
    %11 = arith.truncf %8 : vector<8x256xf32> to vector<8x256xbf16>
    %cst_10 = arith.constant dense<0.000000e+00> : vector<8x128xf32>
    %12 = tpu.matmul %11, %9, %cst_10 {dimension_numbers = #tpu.dot_dimension_numbers<[1], [0], [0], [1], [0, 0, 1, 1], [], []>} : vector<8x256xbf16>, vector<256x128xbf16>, vector<8x128xf32> -> vector<8x128xf32>
    %13 = vector.broadcast %10 : vector<1x128xf32> to vector<8x128xf32>
    %14 = arith.addf %12, %13 : vector<8x128xf32>
    %cst_11 = arith.constant 0.000000e+00 : f32
    %15 = vector.broadcast %cst_11 : f32 to vector<8x128xf32>
    %16 = arith.maximumf %14, %15 : vector<8x128xf32>
    %c0_12 = arith.constant 0 : index
    %c0_13 = arith.constant 0 : index
    %17 = vector.load %arg6[%c0_12, %c0_13] : memref<128x64xbf16, #tpu.memory_space<vmem>>, vector<128x64xbf16>
    %c0_14 = arith.constant 0 : index
    %c0_15 = arith.constant 0 : index
    %18 = vector.load %arg7[%c0_14, %c0_15] : memref<1x64xf32, #tpu.memory_space<vmem>>, vector<1x64xf32>
    %19 = arith.truncf %16 : vector<8x128xf32> to vector<8x128xbf16>
    %cst_16 = arith.constant dense<0.000000e+00> : vector<8x64xf32>
    %20 = tpu.matmul %19, %17, %cst_16 {dimension_numbers = #tpu.dot_dimension_numbers<[1], [0], [0], [1], [0, 0, 1, 1], [], []>} : vector<8x128xbf16>, vector<128x64xbf16>, vector<8x64xf32> -> vector<8x64xf32>
    %21 = vector.broadcast %18 : vector<1x64xf32> to vector<8x64xf32>
    %22 = arith.addf %20, %21 : vector<8x64xf32>
    %cst_17 = arith.constant 0.000000e+00 : f32
    %23 = vector.broadcast %cst_17 : f32 to vector<8x64xf32>
    %24 = arith.maximumf %22, %23 : vector<8x64xf32>
    %c0_18 = arith.constant 0 : index
    %c0_19 = arith.constant 0 : index
    %25 = vector.load %arg8[%c0_18, %c0_19] : memref<64x32xbf16, #tpu.memory_space<vmem>>, vector<64x32xbf16>
    %c0_20 = arith.constant 0 : index
    %c0_21 = arith.constant 0 : index
    %26 = vector.load %arg9[%c0_20, %c0_21] : memref<1x32xf32, #tpu.memory_space<vmem>>, vector<1x32xf32>
    %27 = arith.truncf %24 : vector<8x64xf32> to vector<8x64xbf16>
    %cst_22 = arith.constant dense<0.000000e+00> : vector<8x32xf32>
    %28 = tpu.matmul %27, %25, %cst_22 {dimension_numbers = #tpu.dot_dimension_numbers<[1], [0], [0], [1], [0, 0, 1, 1], [], []>} : vector<8x64xbf16>, vector<64x32xbf16>, vector<8x32xf32> -> vector<8x32xf32>
    %29 = vector.broadcast %26 : vector<1x32xf32> to vector<8x32xf32>
    %30 = arith.addf %28, %29 : vector<8x32xf32>
    %cst_23 = arith.constant 0.000000e+00 : f32
    %31 = vector.broadcast %cst_23 : f32 to vector<8x32xf32>
    %32 = arith.maximumf %30, %31 : vector<8x32xf32>
    %c0_24 = arith.constant 0 : index
    %c0_25 = arith.constant 0 : index
    %33 = vector.load %arg10[%c0_24, %c0_25] : memref<32x10xbf16, #tpu.memory_space<vmem>>, vector<32x10xbf16>
    %c0_26 = arith.constant 0 : index
    %c0_27 = arith.constant 0 : index
    %34 = vector.load %arg11[%c0_26, %c0_27] : memref<1x10xf32, #tpu.memory_space<vmem>>, vector<1x10xf32>
    %35 = arith.truncf %32 : vector<8x32xf32> to vector<8x32xbf16>
    %cst_28 = arith.constant dense<0.000000e+00> : vector<8x10xf32>
    %36 = tpu.matmul %35, %33, %cst_28 {dimension_numbers = #tpu.dot_dimension_numbers<[1], [0], [0], [1], [0, 0, 1, 1], [], []>} : vector<8x32xbf16>, vector<32x10xbf16>, vector<8x10xf32> -> vector<8x10xf32>
    %37 = vector.broadcast %34 : vector<1x10xf32> to vector<8x10xf32>
    %38 = arith.addf %36, %37 : vector<8x10xf32>
    %c0_29 = arith.constant 0 : index
    %c0_30 = arith.constant 0 : index
    %39 = vector.load %arg12[%c0_29, %c0_30] : memref<8x10xf32, #tpu.memory_space<vmem>>, vector<8x10xf32>
    tpu.vector_store %arg12[%c0_29, %c0_30], %38 {strides = array<i32>} : memref<8x10xf32, #tpu.memory_space<vmem>>, vector<8x10xf32>,
    return
  }
  func.func @transform_0(%arg0: i32) -> (i32, i32) {
    %c0_i32 = arith.constant 0 : i32
    %c0_i32_0 = arith.constant 0 : i32
    return %arg0, %c0_i32 : i32, i32
  }
  func.func @transform_1(%arg0: i32) -> (i32, i32) {
    %c0_i32 = arith.constant 0 : i32
    %c0_i32_0 = arith.constant 0 : i32
    %c0_i32_1 = arith.constant 0 : i32
    return %c0_i32, %c0_i32_0 : i32, i32
  }
  func.func @transform_2(%arg0: i32) -> (i32, i32) {
    %c0_i32 = arith.constant 0 : i32
    %c0_i32_0 = arith.constant 0 : i32
    %c0_i32_1 = arith.constant 0 : i32
    return %c0_i32, %c0_i32_0 : i32, i32
  }
  func.func @transform_3(%arg0: i32) -> (i32, i32) {
    %c0_i32 = arith.constant 0 : i32
    %c0_i32_0 = arith.constant 0 : i32
    %c0_i32_1 = arith.constant 0 : i32
    return %c0_i32, %c0_i32_0 : i32, i32
  }
  func.func @transform_4(%arg0: i32) -> (i32, i32) {
    %c0_i32 = arith.constant 0 : i32
    %c0_i32_0 = arith.constant 0 : i32
    %c0_i32_1 = arith.constant 0 : i32
    return %c0_i32, %c0_i32_0 : i32, i32
  }
  func.func @transform_5(%arg0: i32) -> (i32, i32) {
    %c0_i32 = arith.constant 0 : i32
    %c0_i32_0 = arith.constant 0 : i32
    %c0_i32_1 = arith.constant 0 : i32
    return %c0_i32, %c0_i32_0 : i32, i32
  }
  func.func @transform_6(%arg0: i32) -> (i32, i32) {
    %c0_i32 = arith.constant 0 : i32
    %c0_i32_0 = arith.constant 0 : i32
    %c0_i32_1 = arith.constant 0 : i32
    return %c0_i32, %c0_i32_0 : i32, i32
  }
  func.func @transform_7(%arg0: i32) -> (i32, i32) {
    %c0_i32 = arith.constant 0 : i32
    %c0_i32_0 = arith.constant 0 : i32
    %c0_i32_1 = arith.constant 0 : i32
    return %c0_i32, %c0_i32_0 : i32, i32
  }
  func.func @transform_8(%arg0: i32) -> (i32, i32) {
    %c0_i32 = arith.constant 0 : i32
    %c0_i32_0 = arith.constant 0 : i32
    %c0_i32_1 = arith.constant 0 : i32
    return %c0_i32, %c0_i32_0 : i32, i32
  }
  func.func @transform_9(%arg0: i32) -> (i32, i32) {
    %c0_i32 = arith.constant 0 : i32
    %c0_i32_0 = arith.constant 0 : i32
    %c0_i32_1 = arith.constant 0 : i32
    return %c0_i32, %c0_i32_0 : i32, i32
  }
  func.func @transform_10(%arg0: i32) -> (i32, i32) {
    %c0_i32 = arith.constant 0 : i32
    %c0_i32_0 = arith.constant 0 : i32
    %c0_i32_1 = arith.constant 0 : i32
    return %c0_i32, %c0_i32_0 : i32, i32
  }
  func.func @transform_11(%arg0: i32) -> (i32, i32) {
    %c0_i32 = arith.constant 0 : i32
    %c0_i32_0 = arith.constant 0 : i32
    return %arg0, %c0_i32 : i32, i32
  }
}

</mosaic_0001>

<llo_original>
// kernel: mlp_forward.1
$region0: #{mlp_forward.1}
  #allocation0 [shape = 'u32[]', space=smem, size = 0x4, offset = 0x4, fixed_abs, tag = 'smem constant byte address 0x4 - core index']
  #allocation1 [shape = 'u32[144,128]{1,0:T(1,128)}', space=vmem, size = 0x12000, scoped, tag = 'internal scratch']
  %s0 = inlined_call_operand.hbm [shape: f32[8,32], index: 0, kind: input, shape index: {}]
  %s1 = inlined_call_operand.hbm [shape: bf16[32,256], index: 1, kind: input, shape index: {}]
  %s2 = inlined_call_operand.vmem [shape: f32[1,256], index: 2, kind: input, shape index: {}]
  %s3 = inlined_call_operand.vmem [shape: bf16[256,128], index: 3, kind: input, shape index: {}]
  %s4 = inlined_call_operand.vmem [shape: f32[1,128], index: 4, kind: input, shape index: {}]
  %s5 = inlined_call_operand.vmem [shape: bf16[128,64], index: 5, kind: input, shape index: {}]
  %s6 = inlined_call_operand.vmem [shape: f32[1,64], index: 6, kind: input, shape index: {}]
  %s7 = inlined_call_operand.vmem [shape: bf16[64,32], index: 7, kind: input, shape index: {}]
  %s8 = inlined_call_operand.vmem [shape: f32[1,32], index: 8, kind: input, shape index: {}]
  %s9 = inlined_call_operand.vmem [shape: bf16[32,10], index: 9, kind: input, shape index: {}]
  %s10 = inlined_call_operand.vmem [shape: f32[1,10], index: 10, kind: input, shape index: {}]
  %s11 = inlined_call_operand.hbm [shape: f32[8,10], index: 11, kind: output, shape index: {}]
  %s12 = sld [smem:[#allocation0]]
  $region62: #{mlp_forward.1} parent=0
    _
  %s14 = ssub.s32 1, %s12
  %s15 = scalar_select 0, %s14, %s12
  $region1: #{mlp_forward.1} parent=0
    #allocation2 [shape = 'u8[4096]{0}', space=vmem, size = 0x1000, scoped, tag = 'input window, operand 0, single buffered']
    #allocation3 [shape = 's32[1]{0}', space=sflag, size = 0x4, scoped, tag = 'scoped memory for mlp_forward.1']
    #allocation4 [shape = 's32[1]{0}', space=sflag, size = 0x4, scoped, tag = 'scoped memory for mlp_forward.1']
    #allocation5 [shape = 'u8[16384]{0}', space=vmem, size = 0x4000, scoped, tag = 'input window, operand 1, single buffered']
    #allocation6 [shape = 's32[1]{0}', space=sflag, size = 0x4, scoped, tag = 'scoped memory for mlp_forward.1']
    #allocation7 [shape = 'u8[4096]{0}', space=vmem, size = 0x1000, scoped, tag = 'output window, operand 0, single buffered']
    %16 = vsyncpa [#allocation3], 0
    %17 = vsyncpa [#allocation6], 0
    %18 = vsyncpa [#allocation4], 0
    // Predicated region
    $region2: #{mlp_forward.1} parent=1 // pred_check
      _
    $region3: #{mlp_forward.1} parent=1 // pred_check_branch
      %20 = sbr.rel (0) target = $region5
    $region4: #{mlp_forward.1} parent=1 // pred_region
      %s22 = ssub.s32 128, 128
      %23 = vsyncadd [#allocation3], %s22
      %s25 = sshll.u32 [#allocation2], 4
      %s26 = int_to_ptr.vmem [resolvable:$true] %s25
      %28 = dma.hbm_to_vmem [thread:$0]  %s0, 128, %s26, [#allocation3]
    $region5: #{mlp_forward.1} parent=1 // pred_fallthru
      _
    // Predicated region
    $region6: #{mlp_forward.1} parent=1 // pred_check
      _
    $region7: #{mlp_forward.1} parent=1 // pred_check_branch
      %30 = sbr.rel (0) target = $region9
    $region8: #{mlp_forward.1} parent=1 // pred_region
      %s32 = ssub.s32 512, 512
      %33 = vsyncadd [#allocation6], %s32
      %s34 = sshll.u32 [#allocation5], 4
      %s35 = int_to_ptr.vmem [resolvable:$true] %s34
      %40 = dma.hbm_to_vmem [thread:$0]  %s1, 512, %s35, [#allocation6], 128, 128, 8
    $region9: #{mlp_forward.1} parent=1 // pred_fallthru
      _
    // Predicated region
    $region10: #{mlp_forward.1} parent=1 // pred_check
      _
    $region11: #{mlp_forward.1} parent=1 // pred_check_branch
      %42 = sbr.rel (0) target = $region13
    $region12: #{mlp_forward.1} parent=1 // pred_region
      _
    $region13: #{mlp_forward.1} parent=1 // pred_fallthru
      _
    // Predicated region
    $region14: #{mlp_forward.1} parent=1 // pred_check
      _
    $region15: #{mlp_forward.1} parent=1 // pred_check_branch
      %44 = sbr.rel (0) target = $region17
    $region16: #{mlp_forward.1} parent=1 // pred_region
      _
    $region17: #{mlp_forward.1} parent=1 // pred_fallthru
      _
    // Predicated region
    $region18: #{mlp_forward.1} parent=1 // pred_check
      _
    $region19: #{mlp_forward.1} parent=1 // pred_check_branch
      %46 = sbr.rel (0) target = $region21
    $region20: #{mlp_forward.1} parent=1 // pred_region
      _
    $region21: #{mlp_forward.1} parent=1 // pred_fallthru
      _
    // Predicated region
    $region22: #{mlp_forward.1} parent=1 // pred_check
      _
    $region23: #{mlp_forward.1} parent=1 // pred_check_branch
      %48 = sbr.rel (0) target = $region25
    $region24: #{mlp_forward.1} parent=1 // pred_region
      _
    $region25: #{mlp_forward.1} parent=1 // pred_fallthru
      _
    // Predicated region
    $region26: #{mlp_forward.1} parent=1 // pred_check
      _
    $region27: #{mlp_forward.1} parent=1 // pred_check_branch
      %50 = sbr.rel (0) target = $region29
    $region28: #{mlp_forward.1} parent=1 // pred_region
      _
    $region29: #{mlp_forward.1} parent=1 // pred_fallthru
      _
    // Predicated region
    $region30: #{mlp_forward.1} parent=1 // pred_check
      _
    $region31: #{mlp_forward.1} parent=1 // pred_check_branch
      %52 = sbr.rel (0) target = $region33
    $region32: #{mlp_forward.1} parent=1 // pred_region
      _
    $region33: #{mlp_forward.1} parent=1 // pred_fallthru
      _
    // Predicated region
    $region34: #{mlp_forward.1} parent=1 // pred_check
      _
    $region35: #{mlp_forward.1} parent=1 // pred_check_branch
      %54 = sbr.rel (0) target = $region37
    $region36: #{mlp_forward.1} parent=1 // pred_region
      _
    $region37: #{mlp_forward.1} parent=1 // pred_fallthru
      _
    // Predicated region
    $region38: #{mlp_forward.1} parent=1 // pred_check
      _
    $region39: #{mlp_forward.1} parent=1 // pred_check_branch
      %56 = sbr.rel (0) target = $region41
    $region40: #{mlp_forward.1} parent=1 // pred_region
      _
    $region41: #{mlp_forward.1} parent=1 // pred_fallthru
      _
    // Predicated region
    $region42: #{mlp_forward.1} parent=1 // pred_check
      _
    $region43: #{mlp_forward.1} parent=1 // pred_check_branch
      %58 = sbr.rel (0) target = $region45
    $region44: #{mlp_forward.1} parent=1 // pred_region
      _
    $region45: #{mlp_forward.1} parent=1 // pred_fallthru
      _
    // Predicated region
    $region46: #{mlp_forward.1} parent=1 // pred_check
      _
    $region47: #{mlp_forward.1} parent=1 // pred_check_branch
      %60 = sbr.rel (0) target = $region49
    $region48: #{mlp_forward.1} parent=1 // pred_region
      %61 = dma.done [#allocation3], 128
    $region49: #{mlp_forward.1} parent=1 // pred_fallthru
      _
    // Predicated region
    $region50: #{mlp_forward.1} parent=1 // pred_check
      _
    $region51: #{mlp_forward.1} parent=1 // pred_check_branch
      %63 = sbr.rel (0) target = $region53
    $region52: #{mlp_forward.1} parent=1 // pred_region
      %64 = dma.done [#allocation6], 512
    $region53: #{mlp_forward.1} parent=1 // pred_fallthru
      _
    %v66 = vld [vmem:[#allocation2] sm:$0xff]
    %v67 = vld [vmem:[#allocation5] sm:$0xff]
    %v68 = vld [vmem:[#allocation5 + $0x8] sm:$0xff]
    %v69 = vld [vmem:[#allocation5 + $0x10] sm:$0xff]
    %v70 = vld [vmem:[#allocation5 + $0x18] sm:$0xff]
    %v71 = vld [vmem:[%s2] sm:$0x3]
    %v72 = vpack.c.bf16 %v66, %v66
    %v74 = vlaneseq
    %v75 = vshrl.u32 %v74, 7
    %v76 = vsub.s32 0, %v75
    %v77 = vrot.slane %v71, %v76
    %v78 = vlaneseq
    %v79 = vshrl.u32 %v78, 7
    %v80 = vsub.s32 1, %v79
    %v81 = vrot.slane %v71, %v80
    %v88 = vunpack.c.l.b16 %v67
    %v89 = vunpack.c.h.b16 %v67
    %v90 = vunpack.c.l.b16 %v68
    %v91 = vunpack.c.h.b16 %v68
    %v92 = vunpack.c.l.b16 %v69
    %v93 = vunpack.c.h.b16 %v69
    %v94 = vunpack.c.l.b16 %v70
    %v95 = vunpack.c.h.b16 %v70
    %v96 = vpack.c.b16 %v90, %v88
    %v97 = vpack.c.b16 %v91, %v89
    %v98 = vpack.c.b16 %v94, %v92
    %v99 = vpack.c.b16 %v95, %v93
    %vm104 = vcmask 261120
    %v106 = vsel %vm104, %v72, 0
    %108 = vmatprep.subr.bf16.mxu0 %v97
    %109 = vmatpush1.bf16.msra.mxu0 %v96
    %110 = vmatprep.subr.bf16.mxu0 %v99
    %111 = vmatpush1.bf16.msra.mxu0 %v98
    %112 = vmatprep.subr.bf16.mxu0 0
    %113 = vmatpush1.bf16.msra.mxu0 0
    %114 = vmatprep.subr.bf16.mxu0 0
    %115 = vmatpush1.bf16.msra.mxu0 0
    %116 = vmatprep.subr.bf16.mxu0 0
    %117 = vmatpush1.bf16.msra.mxu0 0
    %118 = vmatprep.subr.bf16.mxu0 0
    %119 = vmatpush1.bf16.msra.mxu0 0
    %120 = vmatprep.subr.bf16.mxu0 0
    %121 = vmatpush1.bf16.msra.mxu0 0
    %122 = vmatprep.subr.bf16.mxu0 0
    %123 = vmatpush1.bf16.msra.mxu0 0
    %124 = vmatprep.subr.bf16.mxu0 0
    %125 = vmatpush1.bf16.msra.mxu0 0
    %126 = vmatprep.subr.bf16.mxu0 0
    %127 = vmatpush1.bf16.msra.mxu0 0
    %128 = vmatprep.subr.bf16.mxu0 0
    %129 = vmatpush1.bf16.msra.mxu0 0
    %130 = vmatprep.subr.bf16.mxu0 0
    %131 = vmatpush1.bf16.msra.mxu0 0
    %132 = vmatprep.subr.bf16.mxu0 0
    %133 = vmatpush1.bf16.msra.mxu0 0
    %134 = vmatprep.subr.bf16.mxu0 0
    %135 = vmatpush1.bf16.msra.mxu0 0
    %136 = vmatprep.subr.bf16.mxu0 0
    %137 = vmatpush1.bf16.msra.mxu0 0
    %138 = vmatprep.subr.bf16.mxu0 0
    %139 = vmatpush1.bf16.msra.mxu0 0
    %140 = vmatprep.mubr.bf16.mxu0 0
    %141 = vmatmul.mubr.bf16.gmra.mrb[0].mxu0 %v106
    %v142 = vpop.f32.mrb[0].mxu0
    %v143 = vadd.f32 %v77, %v142
    %v144 = vpop.f32.mrb[0].mxu0
    %v145 = vadd.f32 %v81, %v144
    %v146 = vpop.f32.mrb[0].mxu0
    %v147 = vpop.f32.mrb[0].mxu0
    %148 = vdwg.mxu0
    %v149 = vmax.f32 %v143, 0.0
    %v150 = vmax.f32 %v145, 0.0
    %v151 = vld [vmem:[%s3] sm:$0xf]
    %v152 = vld [vmem:[%s3 + $0x4] sm:$0xf]
    %v153 = vld [vmem:[%s3 + $0x8] sm:$0xf]
    %v154 = vld [vmem:[%s3 + $0xc] sm:$0xf]
    %v155 = vld [vmem:[%s3 + $0x10] sm:$0xf]
    %v156 = vld [vmem:[%s3 + $0x14] sm:$0xf]
    %v157 = vld [vmem:[%s3 + $0x18] sm:$0xf]
    %v158 = vld [vmem:[%s3 + $0x1c] sm:$0xf]
    %v159 = vld [vmem:[%s3 + $0x20] sm:$0xf]
    %v160 = vld [vmem:[%s3 + $0x24] sm:$0xf]
    %v161 = vld [vmem:[%s3 + $0x28] sm:$0xf]
    %v162 = vld [vmem:[%s3 + $0x2c] sm:$0xf]
    %v163 = vld [vmem:[%s3 + $0x30] sm:$0xf]
    %v164 = vld [vmem:[%s3 + $0x34] sm:$0xf]
    %v165 = vld [vmem:[%s3 + $0x38] sm:$0xf]
    %v166 = vld [vmem:[%s3 + $0x3c] sm:$0xf]
    %v167 = vld [vmem:[%s3 + $0x40] sm:$0xf]
    %v168 = vld [vmem:[%s3 + $0x44] sm:$0xf]
    %v169 = vld [vmem:[%s3 + $0x48] sm:$0xf]
    %v170 = vld [vmem:[%s3 + $0x4c] sm:$0xf]
    %v171 = vld [vmem:[%s3 + $0x50] sm:$0xf]
    %v172 = vld [vmem:[%s3 + $0x54] sm:$0xf]
    %v173 = vld [vmem:[%s3 + $0x58] sm:$0xf]
    %v174 = vld [vmem:[%s3 + $0x5c] sm:$0xf]
    %v175 = vld [vmem:[%s3 + $0x60] sm:$0xf]
    %v176 = vld [vmem:[%s3 + $0x64] sm:$0xf]
    %v177 = vld [vmem:[%s3 + $0x68] sm:$0xf]
    %v178 = vld [vmem:[%s3 + $0x6c] sm:$0xf]
    %v179 = vld [vmem:[%s3 + $0x70] sm:$0xf]
    %v180 = vld [vmem:[%s3 + $0x74] sm:$0xf]
    %v181 = vld [vmem:[%s3 + $0x78] sm:$0xf]
    %v182 = vld [vmem:[%s3 + $0x7c] sm:$0xf]
    %v183 = vld [vmem:[%s4] sm:$0x1]
    %v184 = vpack.c.bf16 %v149, %v149
    %v185 = vpack.c.bf16 %v150, %v150
    %v187 = vlaneseq
    %v188 = vshrl.u32 %v187, 7
    %v189 = vsub.s32 0, %v188
    %v190 = vrot.slane %v183, %v189
    %v224 = vunpack.c.l.b16 %v151
    %v225 = vunpack.c.l.b16 %v152
    %v226 = vunpack.c.l.b16 %v153
    %v227 = vunpack.c.l.b16 %v154
    %v228 = vunpack.c.l.b16 %v155
    %v229 = vunpack.c.l.b16 %v156
    %v230 = vunpack.c.l.b16 %v157
    %v231 = vunpack.c.l.b16 %v158
    %v232 = vunpack.c.l.b16 %v159
    %v233 = vunpack.c.l.b16 %v160
    %v234 = vunpack.c.l.b16 %v161
    %v235 = vunpack.c.l.b16 %v162
    %v236 = vunpack.c.l.b16 %v163
    %v237 = vunpack.c.l.b16 %v164
    %v238 = vunpack.c.l.b16 %v165
    %v239 = vunpack.c.l.b16 %v166
    %v240 = vunpack.c.l.b16 %v167
    %v241 = vunpack.c.l.b16 %v168
    %v242 = vunpack.c.l.b16 %v169
    %v243 = vunpack.c.l.b16 %v170
    %v244 = vunpack.c.l.b16 %v171
    %v245 = vunpack.c.l.b16 %v172
    %v246 = vunpack.c.l.b16 %v173
    %v247 = vunpack.c.l.b16 %v174
    %v248 = vunpack.c.l.b16 %v175
    %v249 = vunpack.c.l.b16 %v176
    %v250 = vunpack.c.l.b16 %v177
    %v251 = vunpack.c.l.b16 %v178
    %v252 = vunpack.c.l.b16 %v179
    %v253 = vunpack.c.l.b16 %v180
    %v254 = vunpack.c.l.b16 %v181
    %v255 = vunpack.c.l.b16 %v182
    %v256 = vpack.c.b16 %v225, %v224
    %v257 = vpack.c.b16 %v227, %v226
    %v258 = vpack.c.b16 %v229, %v228
    %v259 = vpack.c.b16 %v231, %v230
    %v260 = vpack.c.b16 %v233, %v232
    %v261 = vpack.c.b16 %v235, %v234
    %v262 = vpack.c.b16 %v237, %v236
    %v263 = vpack.c.b16 %v239, %v238
    %v264 = vpack.c.b16 %v241, %v240
    %v265 = vpack.c.b16 %v243, %v242
    %v266 = vpack.c.b16 %v245, %v244
    %v267 = vpack.c.b16 %v247, %v246
    %v268 = vpack.c.b16 %v249, %v248
    %v269 = vpack.c.b16 %v251, %v250
    %v270 = vpack.c.b16 %v253, %v252
    %v271 = vpack.c.b16 %v255, %v254
    %288 = vmatprep.subr.bf16.mxu0 0
    %289 = vmatpush1.bf16.msra.mxu0 %v256
    %290 = vmatprep.subr.bf16.mxu0 0
    %291 = vmatpush1.bf16.msra.mxu0 %v257
    %292 = vmatprep.subr.bf16.mxu0 0
    %293 = vmatpush1.bf16.msra.mxu0 %v258
    %294 = vmatprep.subr.bf16.mxu0 0
    %295 = vmatpush1.bf16.msra.mxu0 %v259
    %296 = vmatprep.subr.bf16.mxu0 0
    %297 = vmatpush1.bf16.msra.mxu0 %v260
    %298 = vmatprep.subr.bf16.mxu0 0
    %299 = vmatpush1.bf16.msra.mxu0 %v261
    %300 = vmatprep.subr.bf16.mxu0 0
    %301 = vmatpush1.bf16.msra.mxu0 %v262
    %302 = vmatprep.subr.bf16.mxu0 0
    %303 = vmatpush1.bf16.msra.mxu0 %v263
    %304 = vmatprep.subr.bf16.mxu0 0
    %305 = vmatpush1.bf16.msra.mxu0 %v264
    %306 = vmatprep.subr.bf16.mxu0 0
    %307 = vmatpush1.bf16.msra.mxu0 %v265
    %308 = vmatprep.subr.bf16.mxu0 0
    %309 = vmatpush1.bf16.msra.mxu0 %v266
    %310 = vmatprep.subr.bf16.mxu0 0
    %311 = vmatpush1.bf16.msra.mxu0 %v267
    %312 = vmatprep.subr.bf16.mxu0 0
    %313 = vmatpush1.bf16.msra.mxu0 %v268
    %314 = vmatprep.subr.bf16.mxu0 0
    %315 = vmatpush1.bf16.msra.mxu0 %v269
    %316 = vmatprep.subr.bf16.mxu0 0
    %317 = vmatpush1.bf16.msra.mxu0 %v270
    %318 = vmatprep.subr.bf16.mxu0 0
    %319 = vmatpush1.bf16.msra.mxu0 %v271
    %320 = vmatprep.mubr.bf16.mxu0 %v185
    %321 = vmatmul.mubr.bf16.gmra.mrb[0].mxu0 %v184
    %v322 = vpop.f32.mrb[0].mxu0
    %v323 = vadd.f32 %v190, %v322
    %v324 = vpop.f32.mrb[0].mxu0
    %v325 = vpop.f32.mrb[0].mxu0
    %v326 = vpop.f32.mrb[0].mxu0
    %327 = vdwg.mxu0
    %v328 = vmax.f32 %v323, 0.0
    %v329 = vld [vmem:[%s5] sm:$0xf]
    %v330 = vld [vmem:[%s5 + $0x4] sm:$0xf]
    %v331 = vld [vmem:[%s5 + $0x8] sm:$0xf]
    %v332 = vld [vmem:[%s5 + $0xc] sm:$0xf]
    %v333 = vld [vmem:[%s5 + $0x10] sm:$0xf]
    %v334 = vld [vmem:[%s5 + $0x14] sm:$0xf]
    %v335 = vld [vmem:[%s5 + $0x18] sm:$0xf]
    %v336 = vld [vmem:[%s5 + $0x1c] sm:$0xf]
    %v337 = vld [vmem:[%s5 + $0x20] sm:$0xf]
    %v338 = vld [vmem:[%s5 + $0x24] sm:$0xf]
    %v339 = vld [vmem:[%s5 + $0x28] sm:$0xf]
    %v340 = vld [vmem:[%s5 + $0x2c] sm:$0xf]
    %v341 = vld [vmem:[%s5 + $0x30] sm:$0xf]
    %v342 = vld [vmem:[%s5 + $0x34] sm:$0xf]
    %v343 = vld [vmem:[%s5 + $0x38] sm:$0xf]
    %v344 = vld [vmem:[%s5 + $0x3c] sm:$0xf]
    %v345 = vld [vmem:[%s6] sm:$0x1]
    %v346 = vpack.c.bf16 %v328, %v328
    %v348 = vlaneseq
    %v349 = vshrl.u32 %v348, 7
    %v350 = vsub.s32 0, %v349
    %v351 = vrot.slane %v345, %v350
    %v369 = vunpack.c.l.b16 %v329
    %v370 = vunpack.c.l.b16 %v330
    %v371 = vunpack.c.l.b16 %v331
    %v372 = vunpack.c.l.b16 %v332
    %v373 = vunpack.c.l.b16 %v333
    %v374 = vunpack.c.l.b16 %v334
    %v375 = vunpack.c.l.b16 %v335
    %v376 = vunpack.c.l.b16 %v336
    %v377 = vunpack.c.l.b16 %v337
    %v378 = vunpack.c.l.b16 %v338
    %v379 = vunpack.c.l.b16 %v339
    %v380 = vunpack.c.l.b16 %v340
    %v381 = vunpack.c.l.b16 %v341
    %v382 = vunpack.c.l.b16 %v342
    %v383 = vunpack.c.l.b16 %v343
    %v384 = vunpack.c.l.b16 %v344
    %v385 = vpack.c.b16 %v370, %v369
    %v386 = vpack.c.b16 %v372, %v371
    %v387 = vpack.c.b16 %v374, %v373
    %v388 = vpack.c.b16 %v376, %v375
    %v389 = vpack.c.b16 %v378, %v377
    %v390 = vpack.c.b16 %v380, %v379
    %v391 = vpack.c.b16 %v382, %v381
    %v392 = vpack.c.b16 %v384, %v383
    %401 = vmatprep.subr.bf16.mxu0 0
    %402 = vmatpush1.bf16.msra.mxu0 %v385
    %403 = vmatprep.subr.bf16.mxu0 0
    %404 = vmatpush1.bf16.msra.mxu0 %v386
    %405 = vmatprep.subr.bf16.mxu0 0
    %406 = vmatpush1.bf16.msra.mxu0 %v387
    %407 = vmatprep.subr.bf16.mxu0 0
    %408 = vmatpush1.bf16.msra.mxu0 %v388
    %409 = vmatprep.subr.bf16.mxu0 0
    %410 = vmatpush1.bf16.msra.mxu0 %v389
    %411 = vmatprep.subr.bf16.mxu0 0
    %412 = vmatpush1.bf16.msra.mxu0 %v390
    %413 = vmatprep.subr.bf16.mxu0 0
    %414 = vmatpush1.bf16.msra.mxu0 %v391
    %415 = vmatprep.subr.bf16.mxu0 0
    %416 = vmatpush1.bf16.msra.mxu0 %v392
    %417 = vmatprep.subr.bf16.mxu0 0
    %418 = vmatpush1.bf16.msra.mxu0 0
    %419 = vmatprep.subr.bf16.mxu0 0
    %420 = vmatpush1.bf16.msra.mxu0 0
    %421 = vmatprep.subr.bf16.mxu0 0
    %422 = vmatpush1.bf16.msra.mxu0 0
    %423 = vmatprep.subr.bf16.mxu0 0
    %424 = vmatpush1.bf16.msra.mxu0 0
    %425 = vmatprep.subr.bf16.mxu0 0
    %426 = vmatpush1.bf16.msra.mxu0 0
    %427 = vmatprep.subr.bf16.mxu0 0
    %428 = vmatpush1.bf16.msra.mxu0 0
    %429 = vmatprep.subr.bf16.mxu0 0
    %430 = vmatpush1.bf16.msra.mxu0 0
    %431 = vmatprep.subr.bf16.mxu0 0
    %432 = vmatpush1.bf16.msra.mxu0 0
    %433 = vmatprep.mubr.bf16.mxu0 0
    %434 = vmatmul.mubr.bf16.gmra.mrb[0].mxu0 %v346
    %v435 = vpop.f32.mrb[0].mxu0
    %v436 = vadd.f32 %v351, %v435
    %v437 = vpop.f32.mrb[0].mxu0
    %v438 = vpop.f32.mrb[0].mxu0
    %v439 = vpop.f32.mrb[0].mxu0
    %440 = vdwg.mxu0
    %v441 = vmax.f32 %v436, 0.0
    %v442 = vld [vmem:[%s7] sm:$0xf]
    %v443 = vld [vmem:[%s7 + $0x4] sm:$0xf]
    %v444 = vld [vmem:[%s7 + $0x8] sm:$0xf]
    %v445 = vld [vmem:[%s7 + $0xc] sm:$0xf]
    %v446 = vld [vmem:[%s7 + $0x10] sm:$0xf]
    %v447 = vld [vmem:[%s7 + $0x14] sm:$0xf]
    %v448 = vld [vmem:[%s7 + $0x18] sm:$0xf]
    %v449 = vld [vmem:[%s7 + $0x1c] sm:$0xf]
    %v450 = vld [vmem:[%s8] sm:$0x1]
    %v451 = vpack.c.bf16 %v441, %v441
    %v453 = vlaneseq
    %v454 = vshrl.u32 %v453, 7
    %v455 = vsub.s32 0, %v454
    %v456 = vrot.slane %v450, %v455
    %v466 = vunpack.c.l.b16 %v442
    %v467 = vunpack.c.l.b16 %v443
    %v468 = vunpack.c.l.b16 %v444
    %v469 = vunpack.c.l.b16 %v445
    %v470 = vunpack.c.l.b16 %v446
    %v471 = vunpack.c.l.b16 %v447
    %v472 = vunpack.c.l.b16 %v448
    %v473 = vunpack.c.l.b16 %v449
    %v474 = vpack.c.b16 %v467, %v466
    %v475 = vpack.c.b16 %v469, %v468
    %v476 = vpack.c.b16 %v471, %v470
    %v477 = vpack.c.b16 %v473, %v472
    %vm482 = vcmask 523264
    %v484 = vsel %vm482, %v451, 0
    %486 = vmatprep.subr.bf16.mxu0 0
    %487 = vmatpush1.bf16.msra.mxu0 %v474
    %488 = vmatprep.subr.bf16.mxu0 0
    %489 = vmatpush1.bf16.msra.mxu0 %v475
    %490 = vmatprep.subr.bf16.mxu0 0
    %491 = vmatpush1.bf16.msra.mxu0 %v476
    %492 = vmatprep.subr.bf16.mxu0 0
    %493 = vmatpush1.bf16.msra.mxu0 %v477
    %494 = vmatprep.subr.bf16.mxu0 0
    %495 = vmatpush1.bf16.msra.mxu0 0
    %496 = vmatprep.subr.bf16.mxu0 0
    %497 = vmatpush1.bf16.msra.mxu0 0
    %498 = vmatprep.subr.bf16.mxu0 0
    %499 = vmatpush1.bf16.msra.mxu0 0
    %500 = vmatprep.subr.bf16.mxu0 0
    %501 = vmatpush1.bf16.msra.mxu0 0
    %502 = vmatprep.subr.bf16.mxu0 0
    %503 = vmatpush1.bf16.msra.mxu0 0
    %504 = vmatprep.subr.bf16.mxu0 0
    %505 = vmatpush1.bf16.msra.mxu0 0
    %506 = vmatprep.subr.bf16.mxu0 0
    %507 = vmatpush1.bf16.msra.mxu0 0
    %508 = vmatprep.subr.bf16.mxu0 0
    %509 = vmatpush1.bf16.msra.mxu0 0
    %510 = vmatprep.subr.bf16.mxu0 0
    %511 = vmatpush1.bf16.msra.mxu0 0
    %512 = vmatprep.subr.bf16.mxu0 0
    %513 = vmatpush1.bf16.msra.mxu0 0
    %514 = vmatprep.subr.bf16.mxu0 0
    %515 = vmatpush1.bf16.msra.mxu0 0
    %516 = vmatprep.subr.bf16.mxu0 0
    %517 = vmatpush1.bf16.msra.mxu0 0
    %518 = vmatprep.mubr.bf16.mxu0 0
    %519 = vmatmul.mubr.bf16.gmra.mrb[0].mxu0 %v484
    %v520 = vpop.f32.mrb[0].mxu0
    %v521 = vadd.f32 %v456, %v520
    %v522 = vpop.f32.mrb[0].mxu0
    %v523 = vpop.f32.mrb[0].mxu0
    %v524 = vpop.f32.mrb[0].mxu0
    %525 = vdwg.mxu0
    %v526 = vmax.f32 %v521, 0.0
    %v527 = vld [vmem:[%s9] sm:$0xf]
    %v528 = vld [vmem:[%s9 + $0x4] sm:$0xf]
    %v529 = vld [vmem:[%s9 + $0x8] sm:$0xf]
    %v530 = vld [vmem:[%s9 + $0xc] sm:$0xf]
    %v531 = vld [vmem:[%s10] sm:$0x1]
    %v532 = vpack.c.bf16 %v526, %v526
    %v534 = vlaneseq
    %v535 = vshrl.u32 %v534, 7
    %v536 = vsub.s32 0, %v535
    %v537 = vrot.slane %v531, %v536
    %v543 = vunpack.c.l.b16 %v527
    %v544 = vunpack.c.l.b16 %v528
    %v545 = vunpack.c.l.b16 %v529
    %v546 = vunpack.c.l.b16 %v530
    %v547 = vpack.c.b16 %v544, %v543
    %v548 = vpack.c.b16 %v546, %v545
    %v552 = vsel %vm104, %v532, 0
    %554 = vmatprep.subr.bf16.mxu0 0
    %555 = vmatpush1.bf16.msra.mxu0 %v547
    %556 = vmatprep.subr.bf16.mxu0 0
    %557 = vmatpush1.bf16.msra.mxu0 %v548
    %558 = vmatprep.subr.bf16.mxu0 0
    %559 = vmatpush1.bf16.msra.mxu0 0
    %560 = vmatprep.subr.bf16.mxu0 0
    %561 = vmatpush1.bf16.msra.mxu0 0
    %562 = vmatprep.subr.bf16.mxu0 0
    %563 = vmatpush1.bf16.msra.mxu0 0
    %564 = vmatprep.subr.bf16.mxu0 0
    %565 = vmatpush1.bf16.msra.mxu0 0
    %566 = vmatprep.subr.bf16.mxu0 0
    %567 = vmatpush1.bf16.msra.mxu0 0
    %568 = vmatprep.subr.bf16.mxu0 0
    %569 = vmatpush1.bf16.msra.mxu0 0
    %570 = vmatprep.subr.bf16.mxu0 0
    %571 = vmatpush1.bf16.msra.mxu0 0
    %572 = vmatprep.subr.bf16.mxu0 0
    %573 = vmatpush1.bf16.msra.mxu0 0
    %574 = vmatprep.subr.bf16.mxu0 0
    %575 = vmatpush1.bf16.msra.mxu0 0
    %576 = vmatprep.subr.bf16.mxu0 0
    %577 = vmatpush1.bf16.msra.mxu0 0
    %578 = vmatprep.subr.bf16.mxu0 0
    %579 = vmatpush1.bf16.msra.mxu0 0
    %580 = vmatprep.subr.bf16.mxu0 0
    %581 = vmatpush1.bf16.msra.mxu0 0
    %582 = vmatprep.subr.bf16.mxu0 0
    %583 = vmatpush1.bf16.msra.mxu0 0
    %584 = vmatprep.subr.bf16.mxu0 0
    %585 = vmatpush1.bf16.msra.mxu0 0
    %586 = vmatprep.mubr.bf16.mxu0 0
    %587 = vmatmul.mubr.bf16.gmra.mrb[0].mxu0 %v552
    %v588 = vpop.f32.mrb[0].mxu0
    %v589 = vadd.f32 %v537, %v588
    %v590 = vpop.f32.mrb[0].mxu0
    %v591 = vpop.f32.mrb[0].mxu0
    %v592 = vpop.f32.mrb[0].mxu0
    %593 = vdwg.mxu0
    %vm594 = vcmask 80896
    %595 = vst.msk [vmem:[#allocation7] sm:$0xff] %vm594, %v589
    // Predicated region
    $region54: #{mlp_forward.1} parent=1 // pred_check
      _
    $region55: #{mlp_forward.1} parent=1 // pred_check_branch
      %597 = sbr.rel (0) target = $region57
    $region56: #{mlp_forward.1} parent=1 // pred_region
      %s599 = ssub.s32 128, 128
      %600 = vsyncadd [#allocation4], %s599
      %s602 = sshll.u32 [#allocation7], 4
      %s603 = int_to_ptr.vmem [resolvable:$true] %s602
      %605 = dma.vmem_to_hbm [thread:$0]  %s603, 128, %s11, [#allocation4]
    $region57: #{mlp_forward.1} parent=1 // pred_fallthru
      _
    // Predicated region
    $region58: #{mlp_forward.1} parent=1 // pred_check
      _
    $region59: #{mlp_forward.1} parent=1 // pred_check_branch
      %607 = sbr.rel (0) target = $region61
    $region60: #{mlp_forward.1} parent=1 // pred_region
      %608 = dma.done [#allocation4], 128
    $region61: #{mlp_forward.1} parent=1 // pred_fallthru
      _
    %609 = vsyncpa [#allocation3], 1
    %610 = vsyncpa [#allocation6], 1
    %611 = vsyncpa [#allocation4], 1

</llo_original>
